<compile_context>
chip_gen: v5e
topology: v5e:2x2
jax: 0.10.0
libtpu: 0.0.40
codegen_flags: <defaults>
</compile_context>

<pallas_src>
import functools
import math

import jax
import jax.numpy as jnp
from jax import lax
from jax.experimental import pallas as pl
from jax.experimental.pallas import tpu as pltpu


def _bert_att_output_kernel(x_ref, w_ref, b_ref, res_ref, g_ref, beta_ref,
                            o_ref, acc_ref, *, eps):
    """Grid = (M_tiles, K_tiles). K (axis 1) is the reduction axis."""
    k = pl.program_id(1)

    @pl.when(k == 0)
    def _():
        acc_ref[...] = jnp.zeros_like(acc_ref)

    # MXU matmul with f32 accumulation (inputs may be bf16).
    acc_ref[...] += jnp.dot(x_ref[...], w_ref[...],
                            preferred_element_type=jnp.float32)

    @pl.when(k == pl.num_programs(1) - 1)
    def _():
        # f32 epilogue: bias + residual + LayerNorm, single downcast at the end.
        y = acc_ref[...] + b_ref[...].astype(jnp.float32)
        # TODO(synk): dropout is the identity here (inference / p-effectively-0 path);
        # training-mode dropout would use pltpu.prng_seed + pltpu.prng_random_bits.
        y = y + res_ref[...].astype(jnp.float32)
        mean = jnp.mean(y, axis=-1, keepdims=True)
        c = y - mean
        var = jnp.mean(c * c, axis=-1, keepdims=True)
        y = c * lax.rsqrt(var + eps)
        y = y * g_ref[...].astype(jnp.float32) + beta_ref[...].astype(jnp.float32)
        o_ref[...] = y.astype(o_ref.dtype)


def bert_att_output(hidden_states, input_tensor, w_kn, bias, gamma, beta,
                    *, eps=1e-12, tm=256, tk=512):
    """Fused BertAttOutput forward.

    hidden_states, input_tensor: (..., H)
    w_kn: (H, H) pre-transposed weight so the kernel computes x @ W
    bias, gamma, beta: (H,)
    """
    H = hidden_states.shape[-1]
    assert w_kn.shape == (H, H), "weight must be pre-transposed to (K, N) = (H, H)"
    out_dtype = hidden_states.dtype

    x = hidden_states.reshape(-1, H)
    res = input_tensor.reshape(-1, H)
    M, K = x.shape

    # ---- tile selection -----------------------------------------------------
    if M >= tm:
        tm_eff = tm
        m_pad = pl.cdiv(M, tm) * tm
    else:
        m_pad = max(8, ((M + 7) // 8) * 8)   # sublane-aligned single tile
        tm_eff = m_pad

    tk_eff = K                               # full-K fallback (always legal)
    for cand in (512, 256, 128):
        if K % cand == 0:
            tk_eff = cand
            break

    if m_pad != M:
        pad = ((0, m_pad - M), (0, 0))
        x = jnp.pad(x, pad)
        res = jnp.pad(res, pad)

    b2d = bias.reshape(1, H).astype(jnp.float32)
    g2d = gamma.reshape(1, H).astype(jnp.float32)
    beta2d = beta.reshape(1, H).astype(jnp.float32)

    grid = (m_pad // tm_eff, K // tk_eff)

    out = pl.pallas_call(
        functools.partial(_bert_att_output_kernel, eps=eps),
        out_shape=jax.ShapeDtypeStruct((m_pad, H), out_dtype),
        grid_spec=pltpu.PrefetchScalarGridSpec(
            num_scalar_prefetch=0,
            grid=grid,
            in_specs=[
                pl.BlockSpec((tm_eff, tk_eff), lambda i, k: (i, k)),   # x tile
                pl.BlockSpec((tk_eff, H), lambda i, k: (k, 0)),        # weight tile
                pl.BlockSpec((1, H), lambda i, k: (0, 0)),             # bias
                pl.BlockSpec((tm_eff, H), lambda i, k: (i, 0)),        # residual tile
                pl.BlockSpec((1, H), lambda i, k: (0, 0)),             # LN gamma
                pl.BlockSpec((1, H), lambda i, k: (0, 0)),             # LN beta
            ],
            out_specs=pl.BlockSpec((tm_eff, H), lambda i, k: (i, 0)),
            scratch_shapes=[pltpu.VMEM((tm_eff, H), jnp.float32)],     # f32 accumulator
        ),
        compiler_params=pltpu.CompilerParams(
            dimension_semantics=("parallel", "arbitrary")),
    )(x, w_kn, b2d, res, g2d, beta2d)

    out = out[:M]
    return out.reshape(hidden_states.shape)


def init_bert_att_output_params(key, hidden_size, weight_dtype=jnp.bfloat16):
    """nn.Linear-style init; weight is pre-transposed to (in, out) ONCE here."""
    k_w, k_b, k_g, k_beta = jax.random.split(key, 4)
    bound = 1.0 / math.sqrt(hidden_size)
    w_oi = jax.random.uniform(k_w, (hidden_size, hidden_size), jnp.float32, -bound, bound)
    w_kn = jnp.transpose(w_oi).astype(weight_dtype)          # (K, N), hoisted out of forward
    bias = jax.random.uniform(k_b, (hidden_size,), jnp.float32, -bound, bound)
    gamma = 1.0 + 0.1 * jax.random.normal(k_g, (hidden_size,), jnp.float32)
    beta = 0.1 * jax.random.normal(k_beta, (hidden_size,), jnp.float32)
    return w_kn, bias, gamma, beta


def bert_att_output_reference(hidden_states, input_tensor, w_kn, bias, gamma, beta,
                              eps=1e-12):
    """Pure-JAX f32 reference (dropout = identity in eval mode)."""
    x = hidden_states.astype(jnp.float32).reshape(-1, hidden_states.shape[-1])
    y = x @ w_kn.astype(jnp.float32) + bias.astype(jnp.float32)
    y = y + input_tensor.astype(jnp.float32).reshape(y.shape)
    mean = jnp.mean(y, axis=-1, keepdims=True)
    var = jnp.mean(jnp.square(y - mean), axis=-1, keepdims=True)
    y = (y - mean) / jnp.sqrt(var + eps)
    y = y * gamma.astype(jnp.float32) + beta.astype(jnp.float32)
    return y.reshape(hidden_states.shape)


if __name__ == "__main__":
    key = jax.random.PRNGKey(0)
    k_h, k_r, k_p = jax.random.split(key, 3)

    # Small but lane-dense shapes consistent with the module: (batch, seq, hidden),
    # hidden a multiple of 128 (real config uses hidden_size=1280).
    batch, seq, hidden = 2, 8, 256

    hidden_states = jax.random.normal(k_h, (batch, seq, hidden), jnp.float32).astype(jnp.bfloat16)
    input_tensor = jax.random.normal(k_r, (batch, seq, hidden), jnp.float32).astype(jnp.bfloat16)

    w_kn, bias, gamma, beta = init_bert_att_output_params(k_p, hidden, weight_dtype=jnp.bfloat16)

    out = bert_att_output(hidden_states, input_tensor, w_kn, bias, gamma, beta)
    out = jax.block_until_ready(out)

    ref = bert_att_output_reference(hidden_states, input_tensor, w_kn, bias, gamma, beta)

    assert out.shape == (batch, seq, hidden)
    assert out.dtype == hidden_states.dtype
    max_err = float(jnp.max(jnp.abs(out.astype(jnp.float32) - ref)))
    assert max_err < 3e-2, f"max abs err {max_err}"

    print("KERNEL_OK")
</pallas_src>

<mosaic_0001>
module attributes {stable_mosaic.version = 11 : i64} {
  func.func @_bert_att_output_kernel(%arg0: i32, %arg1: i32, %arg2: memref<16x256xbf16, #tpu.memory_space<vmem>>, %arg3: memref<256x256xbf16, #tpu.memory_space<vmem>>, %arg4: memref<1x256xf32, #tpu.memory_space<vmem>>, %arg5: memref<16x256xbf16, #tpu.memory_space<vmem>>, %arg6: memref<1x256xf32, #tpu.memory_space<vmem>>, %arg7: memref<1x256xf32, #tpu.memory_space<vmem>>, %arg8: memref<16x256xbf16, #tpu.memory_space<vmem>>, %arg9: memref<16x256xf32, #tpu.memory_space<vmem>>) attributes {dimension_semantics = [#tpu.dimension_semantics<parallel>, #tpu.dimension_semantics<arbitrary>], iteration_bounds = array<i64: 1, 1>, scalar_prefetch = 0 : i64, scratch_operands = 1 : i64, tpu.core_type = #tpu.core_type<tc>, window_params = [{transform_indices = @transform_0, window_bounds = array<i64: 16, 256>}, {transform_indices = @transform_1, window_bounds = array<i64: 256, 256>}, {pipeline_mode = #tpu.pipeline_mode<synchronous>, transform_indices = @transform_2, window_bounds = array<i64: 1, 256>}, {transform_indices = @transform_3, window_bounds = array<i64: 16, 256>}, {pipeline_mode = #tpu.pipeline_mode<synchronous>, transform_indices = @transform_4, window_bounds = array<i64: 1, 256>}, {pipeline_mode = #tpu.pipeline_mode<synchronous>, transform_indices = @transform_5, window_bounds = array<i64: 1, 256>}, {transform_indices = @transform_6, window_bounds = array<i64: 16, 256>}]} {
    %c0_i32 = arith.constant 0 : i32
    %0 = arith.cmpi eq, %arg1, %c0_i32 : i32
    %1 = arith.extui %0 : i1 to i32
    %c0_i32_0 = arith.constant 0 : i32
    %2 = arith.cmpi ne, %1, %c0_i32_0 : i32
    scf.if %2 {
      %cst_10 = arith.constant 0.000000e+00 : f32
      %12 = vector.broadcast %cst_10 : f32 to vector<16x256xf32>
      %c0_11 = arith.constant 0 : index
      %c0_12 = arith.constant 0 : index
      %13 = vector.load %arg9[%c0_11, %c0_12] : memref<16x256xf32, #tpu.memory_space<vmem>>, vector<16x256xf32>
      tpu.vector_store %arg9[%c0_11, %c0_12], %12 {strides = array<i32>} : memref<16x256xf32, #tpu.memory_space<vmem>>, vector<16x256xf32>,
    } else {
    }
    %c0 = arith.constant 0 : index
    %c0_1 = arith.constant 0 : index
    %3 = vector.load %arg9[%c0, %c0_1] : memref<16x256xf32, #tpu.memory_space<vmem>>, vector<16x256xf32>
    %c0_2 = arith.constant 0 : index
    %c0_3 = arith.constant 0 : index
    %4 = vector.load %arg2[%c0_2, %c0_3] : memref<16x256xbf16, #tpu.memory_space<vmem>>, vector<16x256xbf16>
    %c0_4 = arith.constant 0 : index
    %c0_5 = arith.constant 0 : index
    %5 = vector.load %arg3[%c0_4, %c0_5] : memref<256x256xbf16, #tpu.memory_space<vmem>>, vector<256x256xbf16>
    %cst = arith.constant dense<0.000000e+00> : vector<16x256xf32>
    %6 = tpu.matmul %4, %5, %cst {dimension_numbers = #tpu.dot_dimension_numbers<[1], [0], [0], [1], [0, 0, 1, 1], [], []>} : vector<16x256xbf16>, vector<256x256xbf16>, vector<16x256xf32> -> vector<16x256xf32>
    %7 = arith.addf %3, %6 : vector<16x256xf32>
    %c0_6 = arith.constant 0 : index
    %c0_7 = arith.constant 0 : index
    %8 = vector.load %arg9[%c0_6, %c0_7] : memref<16x256xf32, #tpu.memory_space<vmem>>, vector<16x256xf32>
    tpu.vector_store %arg9[%c0_6, %c0_7], %7 {strides = array<i32>} : memref<16x256xf32, #tpu.memory_space<vmem>>, vector<16x256xf32>,
    %c0_i32_8 = arith.constant 0 : i32
    %9 = arith.cmpi eq, %arg1, %c0_i32_8 : i32
    %10 = arith.extui %9 : i1 to i32
    %c0_i32_9 = arith.constant 0 : i32
    %11 = arith.cmpi ne, %10, %c0_i32_9 : i32
    scf.if %11 {
      %c0_10 = arith.constant 0 : index
      %c0_11 = arith.constant 0 : index
      %12 = vector.load %arg9[%c0_10, %c0_11] : memref<16x256xf32, #tpu.memory_space<vmem>>, vector<16x256xf32>
      %c0_12 = arith.constant 0 : index
      %c0_13 = arith.constant 0 : index
      %13 = vector.load %arg4[%c0_12, %c0_13] : memref<1x256xf32, #tpu.memory_space<vmem>>, vector<1x256xf32>
      %14 = vector.broadcast %13 : vector<1x256xf32> to vector<16x256xf32>
      %15 = arith.addf %12, %14 : vector<16x256xf32>
      %c0_14 = arith.constant 0 : index
      %c0_15 = arith.constant 0 : index
      %16 = vector.load %arg5[%c0_14, %c0_15] : memref<16x256xbf16, #tpu.memory_space<vmem>>, vector<16x256xbf16>
      %17 = arith.extf %16 : vector<16x256xbf16> to vector<16x256xf32>
      %18 = arith.addf %15, %17 : vector<16x256xf32>
      %cst_16 = arith.constant dense<0.000000e+00> : vector<16xf32>
      %19 = vector.multi_reduction <add>, %18, %cst_16 [1] : vector<16x256xf32> to vector<16xf32>
      %20 = vector.shape_cast %19 : vector<16xf32> to vector<16x1xf32>
      %cst_17 = arith.constant 2.560000e+02 : f32
      %21 = vector.broadcast %cst_17 : f32 to vector<16x1xf32>
      %22 = arith.divf %20, %21 : vector<16x1xf32>
      %23 = vector.broadcast %22 : vector<16x1xf32> to vector<16x256xf32>
      %24 = arith.subf %18, %23 : vector<16x256xf32>
      %25 = arith.mulf %24, %24 : vector<16x256xf32>
      %cst_18 = arith.constant dense<0.000000e+00> : vector<16xf32>
      %26 = vector.multi_reduction <add>, %25, %cst_18 [1] : vector<16x256xf32> to vector<16xf32>
      %27 = vector.shape_cast %26 : vector<16xf32> to vector<16x1xf32>
      %cst_19 = arith.constant 2.560000e+02 : f32
      %28 = vector.broadcast %cst_19 : f32 to vector<16x1xf32>
      %29 = arith.divf %27, %28 : vector<16x1xf32>
      %cst_20 = arith.constant 9.99999996E-13 : f32
      %30 = vector.broadcast %cst_20 : f32 to vector<16x1xf32>
      %31 = arith.addf %29, %30 : vector<16x1xf32>
      %32 = math.rsqrt %31 : vector<16x1xf32>
      %33 = vector.broadcast %32 : vector<16x1xf32> to vector<16x256xf32>
      %34 = arith.mulf %24, %33 : vector<16x256xf32>
      %c0_21 = arith.constant 0 : index
      %c0_22 = arith.constant 0 : index
      %35 = vector.load %arg6[%c0_21, %c0_22] : memref<1x256xf32, #tpu.memory_space<vmem>>, vector<1x256xf32>
      %36 = vector.broadcast %35 : vector<1x256xf32> to vector<16x256xf32>
      %37 = arith.mulf %34, %36 : vector<16x256xf32>
      %c0_23 = arith.constant 0 : index
      %c0_24 = arith.constant 0 : index
      %38 = vector.load %arg7[%c0_23, %c0_24] : memref<1x256xf32, #tpu.memory_space<vmem>>, vector<1x256xf32>
      %39 = vector.broadcast %38 : vector<1x256xf32> to vector<16x256xf32>
      %40 = arith.addf %37, %39 : vector<16x256xf32>
      %41 = arith.truncf %40 : vector<16x256xf32> to vector<16x256xbf16>
      %c0_25 = arith.constant 0 : index
      %c0_26 = arith.constant 0 : index
      %42 = vector.load %arg8[%c0_25, %c0_26] : memref<16x256xbf16, #tpu.memory_space<vmem>>, vector<16x256xbf16>
      tpu.vector_store %arg8[%c0_25, %c0_26], %41 {strides = array<i32>} : memref<16x256xbf16, #tpu.memory_space<vmem>>, vector<16x256xbf16>,
    } else {
    }
    return
  }
  func.func @transform_0(%arg0: i32, %arg1: i32) -> (i32, i32) {
    %c0_i32 = arith.constant 0 : i32
    return %arg0, %arg1 : i32, i32
  }
  func.func @transform_1(%arg0: i32, %arg1: i32) -> (i32, i32) {
    %c0_i32 = arith.constant 0 : i32
    %c0_i32_0 = arith.constant 0 : i32
    return %arg1, %c0_i32 : i32, i32
  }
  func.func @transform_2(%arg0: i32, %arg1: i32) -> (i32, i32) {
    %c0_i32 = arith.constant 0 : i32
    %c0_i32_0 = arith.constant 0 : i32
    %c0_i32_1 = arith.constant 0 : i32
    return %c0_i32, %c0_i32_0 : i32, i32
  }
  func.func @transform_3(%arg0: i32, %arg1: i32) -> (i32, i32) {
    %c0_i32 = arith.constant 0 : i32
    %c0_i32_0 = arith.constant 0 : i32
    return %arg0, %c0_i32 : i32, i32
  }
  func.func @transform_4(%arg0: i32, %arg1: i32) -> (i32, i32) {
    %c0_i32 = arith.constant 0 : i32
    %c0_i32_0 = arith.constant 0 : i32
    %c0_i32_1 = arith.constant 0 : i32
    return %c0_i32, %c0_i32_0 : i32, i32
  }
  func.func @transform_5(%arg0: i32, %arg1: i32) -> (i32, i32) {
    %c0_i32 = arith.constant 0 : i32
    %c0_i32_0 = arith.constant 0 : i32
    %c0_i32_1 = arith.constant 0 : i32
    return %c0_i32, %c0_i32_0 : i32, i32
  }
  func.func @transform_6(%arg0: i32, %arg1: i32) -> (i32, i32) {
    %c0_i32 = arith.constant 0 : i32
    %c0_i32_0 = arith.constant 0 : i32
    return %arg0, %c0_i32 : i32, i32
  }
}

</mosaic_0001>

<llo_original>
// kernel: tpu_custom_call.1
$region0: #{tpu_custom_call.1}
  #allocation0 [shape = 'u32[]', space=smem, size = 0x4, offset = 0x4, fixed_abs, tag = 'smem constant byte address 0x4 - core index']
  #allocation1 [shape = 'u32[72,128]{1,0:T(1,128)}', space=vmem, size = 0x9000, scoped, tag = 'internal scratch']
  #allocation2 [shape = 'f32[16,256]{1,0:T(8,128)}', space=vmem, size = 0x4000, scoped, tag = 'scratch operand']
  %s0 = inlined_call_operand.hbm [shape: bf16[16,256], index: 0, kind: input, shape index: {}]
  %s1 = inlined_call_operand.hbm [shape: bf16[256,256], index: 1, kind: input, shape index: {}]
  %s2 = inlined_call_operand.hbm [shape: f32[1,256], index: 2, kind: input, shape index: {}]
  %s3 = inlined_call_operand.hbm [shape: bf16[16,256], index: 3, kind: input, shape index: {}]
  %s4 = inlined_call_operand.vmem [shape: f32[1,256], index: 4, kind: input, shape index: {}]
  %s5 = inlined_call_operand.vmem [shape: f32[1,256], index: 5, kind: input, shape index: {}]
  %s6 = inlined_call_operand.hbm [shape: bf16[16,256], index: 6, kind: output, shape index: {}]
  %s7 = sld [smem:[#allocation0]]
  $region58: #{tpu_custom_call.1} parent=0
    _
  %s9 = ssub.s32 1, %s7
  %s10 = scalar_select 0, %s9, %s7
  $region1: #{tpu_custom_call.1} parent=0
    #allocation3 [shape = 'u8[8192]{0}', space=vmem, size = 0x2000, scoped, tag = 'input window, operand 0, single buffered']
    #allocation4 [shape = 's32[1]{0}', space=sflag, size = 0x4, scoped, tag = 'scoped memory for tpu_custom_call.1']
    #allocation5 [shape = 's32[1]{0}', space=sflag, size = 0x4, scoped, tag = 'scoped memory for tpu_custom_call.1']
    #allocation6 [shape = 'u8[131072]{0}', space=vmem, size = 0x20000, scoped, tag = 'input window, operand 1, single buffered']
    #allocation7 [shape = 's32[1]{0}', space=sflag, size = 0x4, scoped, tag = 'scoped memory for tpu_custom_call.1']
    #allocation8 [shape = 'u8[1024]{0}', space=vmem, size = 0x400, scoped, tag = 'input window, operand 2, single buffered']
    #allocation9 [shape = 'u8[8192]{0}', space=vmem, size = 0x2000, scoped, tag = 'input window, operand 3, single buffered']
    #allocation10 [shape = 's32[1]{0}', space=sflag, size = 0x4, scoped, tag = 'scoped memory for tpu_custom_call.1']
    #allocation11 [shape = 'u8[8192]{0}', space=vmem, size = 0x2000, scoped, tag = 'output window, operand 0, single buffered']
    %11 = vsyncpa [#allocation4], 0
    %12 = vsyncpa [#allocation7], 0
    %13 = vsyncpa [#allocation10], 0
    %14 = vsyncpa [#allocation5], 0
    // Predicated region
    $region2: #{tpu_custom_call.1} parent=1 // pred_check
      _
    $region3: #{tpu_custom_call.1} parent=1 // pred_check_branch
      %16 = sbr.rel (0) target = $region5
    $region4: #{tpu_custom_call.1} parent=1 // pred_region
      %18 = vsyncadd [#allocation4], 0
      %s19 = sshll.u32 %s0, 4
      %s20 = int_to_ptr.hbm [resolvable:$true] %s19
      %s21 = sshll.u32 [#allocation3], 4
      %s22 = int_to_ptr.vmem [resolvable:$true] %s21
      %27 = dma.hbm_to_vmem [thread:$0]  %s20, 256, %s22, [#allocation4], 128, 128, 8
    $region5: #{tpu_custom_call.1} parent=1 // pred_fallthru
      _
    // Predicated region
    $region6: #{tpu_custom_call.1} parent=1 // pred_check
      _
    $region7: #{tpu_custom_call.1} parent=1 // pred_check_branch
      %29 = sbr.rel (0) target = $region9
    $region8: #{tpu_custom_call.1} parent=1 // pred_region
      %31 = vsyncadd [#allocation7], 0
      %s32 = sshll.u32 %s1, 4
      %s33 = int_to_ptr.hbm [resolvable:$true] %s32
      %s34 = sshll.u32 [#allocation6], 4
      %s35 = int_to_ptr.vmem [resolvable:$true] %s34
      %40 = dma.hbm_to_vmem [thread:$0]  %s33, 4096, %s35, [#allocation7], 128, 128, 8
    $region9: #{tpu_custom_call.1} parent=1 // pred_fallthru
      _
    // Predicated region
    $region10: #{tpu_custom_call.1} parent=1 // pred_check
      _
    $region11: #{tpu_custom_call.1} parent=1 // pred_check_branch
      %42 = sbr.rel (0) target = $region13
    $region12: #{tpu_custom_call.1} parent=1 // pred_region
      %44 = vsyncadd [#allocation7], 0
      %s46 = sshll.u32 %s2, 4
      %s47 = int_to_ptr.hbm [resolvable:$true] %s46
      %s48 = sshll.u32 [#allocation8], 4
      %s49 = int_to_ptr.vmem [resolvable:$true] %s48
      %51 = dma.hbm_to_vmem [thread:$0]  %s47, 32, %s49, [#allocation7]
    $region13: #{tpu_custom_call.1} parent=1 // pred_fallthru
      _
    // Predicated region
    $region14: #{tpu_custom_call.1} parent=1 // pred_check
      _
    $region15: #{tpu_custom_call.1} parent=1 // pred_check_branch
      %53 = sbr.rel (0) target = $region17
    $region16: #{tpu_custom_call.1} parent=1 // pred_region
      %55 = vsyncadd [#allocation10], 0
      %s56 = sshll.u32 %s3, 4
      %s57 = int_to_ptr.hbm [resolvable:$true] %s56
      %s58 = sshll.u32 [#allocation9], 4
      %s59 = int_to_ptr.vmem [resolvable:$true] %s58
      %64 = dma.hbm_to_vmem [thread:$0]  %s57, 256, %s59, [#allocation10], 128, 128, 8
    $region17: #{tpu_custom_call.1} parent=1 // pred_fallthru
      _
    // Predicated region
    $region18: #{tpu_custom_call.1} parent=1 // pred_check
      _
    $region19: #{tpu_custom_call.1} parent=1 // pred_check_branch
      %66 = sbr.rel (0) target = $region21
    $region20: #{tpu_custom_call.1} parent=1 // pred_region
      _
    $region21: #{tpu_custom_call.1} parent=1 // pred_fallthru
      _
    // Predicated region
    $region22: #{tpu_custom_call.1} parent=1 // pred_check
      _
    $region23: #{tpu_custom_call.1} parent=1 // pred_check_branch
      %68 = sbr.rel (0) target = $region25
    $region24: #{tpu_custom_call.1} parent=1 // pred_region
      _
    $region25: #{tpu_custom_call.1} parent=1 // pred_fallthru
      _
    // Predicated region
    $region26: #{tpu_custom_call.1} parent=1 // pred_check
      _
    $region27: #{tpu_custom_call.1} parent=1 // pred_check_branch
      %70 = sbr.rel (0) target = $region29
    $region28: #{tpu_custom_call.1} parent=1 // pred_region
      %72 = dma.done [#allocation4], 256
    $region29: #{tpu_custom_call.1} parent=1 // pred_fallthru
      _
    // Predicated region
    $region30: #{tpu_custom_call.1} parent=1 // pred_check
      _
    $region31: #{tpu_custom_call.1} parent=1 // pred_check_branch
      %74 = sbr.rel (0) target = $region33
    $region32: #{tpu_custom_call.1} parent=1 // pred_region
      %76 = dma.done [#allocation7], 4096
    $region33: #{tpu_custom_call.1} parent=1 // pred_fallthru
      _
    // Predicated region
    $region34: #{tpu_custom_call.1} parent=1 // pred_check
      _
    $region35: #{tpu_custom_call.1} parent=1 // pred_check_branch
      %78 = sbr.rel (0) target = $region37
    $region36: #{tpu_custom_call.1} parent=1 // pred_region
      %80 = dma.done [#allocation7], 32
    $region37: #{tpu_custom_call.1} parent=1 // pred_fallthru
      _
    // Predicated region
    $region38: #{tpu_custom_call.1} parent=1 // pred_check
      _
    $region39: #{tpu_custom_call.1} parent=1 // pred_check_branch
      %82 = sbr.rel (0) target = $region41
    $region40: #{tpu_custom_call.1} parent=1 // pred_region
      %84 = dma.done [#allocation10], 256
    $region41: #{tpu_custom_call.1} parent=1 // pred_fallthru
      _
    %p85 = scmp.eq.s32.totalorder 0, 0
    // Predicated region
    $region42: #{tpu_custom_call.1} parent=1 // pred_check
      %p86 = pneg %p85
    $region43: #{tpu_custom_call.1} parent=1 // pred_check_branch
      %88 = sbr.rel (%p86) target = $region45
    $region44: #{tpu_custom_call.1} parent=1 // pred_region
      %89 = vst [vmem:[#allocation2] sm:$0xff] 0.0
      %90 = vst [vmem:[#allocation2 + $0x8] sm:$0xff] 0.0
      %91 = vst [vmem:[#allocation2 + $0x10] sm:$0xff] 0.0
      %92 = vst [vmem:[#allocation2 + $0x18] sm:$0xff] 0.0
    $region45: #{tpu_custom_call.1} parent=1 // pred_fallthru
      _
    %v93 = vld [vmem:[#allocation2] sm:$0xff]
    %v94 = vld [vmem:[#allocation2 + $0x8] sm:$0xff]
    %v95 = vld [vmem:[#allocation2 + $0x10] sm:$0xff]
    %v96 = vld [vmem:[#allocation2 + $0x18] sm:$0xff]
    %v97 = vld [vmem:[#allocation3] sm:$0xff]
    %v98 = vld [vmem:[#allocation3 + $0x8] sm:$0xff]
    %v99 = vld [vmem:[#allocation6] sm:$0xff]
    %v100 = vld [vmem:[#allocation6 + $0x8] sm:$0xff]
    %v101 = vld [vmem:[#allocation6 + $0x10] sm:$0xff]
    %v102 = vld [vmem:[#allocation6 + $0x18] sm:$0xff]
    %v103 = vld [vmem:[#allocation6 + $0x20] sm:$0xff]
    %v104 = vld [vmem:[#allocation6 + $0x28] sm:$0xff]
    %v105 = vld [vmem:[#allocation6 + $0x30] sm:$0xff]
    %v106 = vld [vmem:[#allocation6 + $0x38] sm:$0xff]
    %v107 = vld [vmem:[#allocation6 + $0x40] sm:$0xff]
    %v108 = vld [vmem:[#allocation6 + $0x48] sm:$0xff]
    %v109 = vld [vmem:[#allocation6 + $0x50] sm:$0xff]
    %v110 = vld [vmem:[#allocation6 + $0x58] sm:$0xff]
    %v111 = vld [vmem:[#allocation6 + $0x60] sm:$0xff]
    %v112 = vld [vmem:[#allocation6 + $0x68] sm:$0xff]
    %v113 = vld [vmem:[#allocation6 + $0x70] sm:$0xff]
    %v114 = vld [vmem:[#allocation6 + $0x78] sm:$0xff]
    %v115 = vld [vmem:[#allocation6 + $0x80] sm:$0xff]
    %v116 = vld [vmem:[#allocation6 + $0x88] sm:$0xff]
    %v117 = vld [vmem:[#allocation6 + $0x90] sm:$0xff]
    %v118 = vld [vmem:[#allocation6 + $0x98] sm:$0xff]
    %v119 = vld [vmem:[#allocation6 + $0xa0] sm:$0xff]
    %v120 = vld [vmem:[#allocation6 + $0xa8] sm:$0xff]
    %v121 = vld [vmem:[#allocation6 + $0xb0] sm:$0xff]
    %v122 = vld [vmem:[#allocation6 + $0xb8] sm:$0xff]
    %v123 = vld [vmem:[#allocation6 + $0xc0] sm:$0xff]
    %v124 = vld [vmem:[#allocation6 + $0xc8] sm:$0xff]
    %v125 = vld [vmem:[#allocation6 + $0xd0] sm:$0xff]
    %v126 = vld [vmem:[#allocation6 + $0xd8] sm:$0xff]
    %v127 = vld [vmem:[#allocation6 + $0xe0] sm:$0xff]
    %v128 = vld [vmem:[#allocation6 + $0xe8] sm:$0xff]
    %v129 = vld [vmem:[#allocation6 + $0xf0] sm:$0xff]
    %v130 = vld [vmem:[#allocation6 + $0xf8] sm:$0xff]
    %v133 = vunpack.c.l.b16 %v97
    %v134 = vunpack.c.h.b16 %v97
    %v135 = vunpack.c.l.b16 %v98
    %v136 = vunpack.c.h.b16 %v98
    %v137 = vpack.c.b16 %v135, %v133
    %v138 = vpack.c.b16 %v136, %v134
    %v173 = vunpack.c.l.b16 %v99
    %v174 = vunpack.c.h.b16 %v99
    %v175 = vunpack.c.l.b16 %v100
    %v176 = vunpack.c.h.b16 %v100
    %v177 = vunpack.c.l.b16 %v101
    %v178 = vunpack.c.h.b16 %v101
    %v179 = vunpack.c.l.b16 %v102
    %v180 = vunpack.c.h.b16 %v102
    %v181 = vunpack.c.l.b16 %v103
    %v182 = vunpack.c.h.b16 %v103
    %v183 = vunpack.c.l.b16 %v104
    %v184 = vunpack.c.h.b16 %v104
    %v185 = vunpack.c.l.b16 %v105
    %v186 = vunpack.c.h.b16 %v105
    %v187 = vunpack.c.l.b16 %v106
    %v188 = vunpack.c.h.b16 %v106
    %v189 = vunpack.c.l.b16 %v107
    %v190 = vunpack.c.h.b16 %v107
    %v191 = vunpack.c.l.b16 %v108
    %v192 = vunpack.c.h.b16 %v108
    %v193 = vunpack.c.l.b16 %v109
    %v194 = vunpack.c.h.b16 %v109
    %v195 = vunpack.c.l.b16 %v110
    %v196 = vunpack.c.h.b16 %v110
    %v197 = vunpack.c.l.b16 %v111
    %v198 = vunpack.c.h.b16 %v111
    %v199 = vunpack.c.l.b16 %v112
    %v200 = vunpack.c.h.b16 %v112
    %v201 = vunpack.c.l.b16 %v113
    %v202 = vunpack.c.h.b16 %v113
    %v203 = vunpack.c.l.b16 %v114
    %v204 = vunpack.c.h.b16 %v114
    %v205 = vunpack.c.l.b16 %v115
    %v206 = vunpack.c.h.b16 %v115
    %v207 = vunpack.c.l.b16 %v116
    %v208 = vunpack.c.h.b16 %v116
    %v209 = vunpack.c.l.b16 %v117
    %v210 = vunpack.c.h.b16 %v117
    %v211 = vunpack.c.l.b16 %v118
    %v212 = vunpack.c.h.b16 %v118
    %v213 = vunpack.c.l.b16 %v119
    %v214 = vunpack.c.h.b16 %v119
    %v215 = vunpack.c.l.b16 %v120
    %v216 = vunpack.c.h.b16 %v120
    %v217 = vunpack.c.l.b16 %v121
    %v218 = vunpack.c.h.b16 %v121
    %v219 = vunpack.c.l.b16 %v122
    %v220 = vunpack.c.h.b16 %v122
    %v221 = vunpack.c.l.b16 %v123
    %v222 = vunpack.c.h.b16 %v123
    %v223 = vunpack.c.l.b16 %v124
    %v224 = vunpack.c.h.b16 %v124
    %v225 = vunpack.c.l.b16 %v125
    %v226 = vunpack.c.h.b16 %v125
    %v227 = vunpack.c.l.b16 %v126
    %v228 = vunpack.c.h.b16 %v126
    %v229 = vunpack.c.l.b16 %v127
    %v230 = vunpack.c.h.b16 %v127
    %v231 = vunpack.c.l.b16 %v128
    %v232 = vunpack.c.h.b16 %v128
    %v233 = vunpack.c.l.b16 %v129
    %v234 = vunpack.c.h.b16 %v129
    %v235 = vunpack.c.l.b16 %v130
    %v236 = vunpack.c.h.b16 %v130
    %v237 = vpack.c.b16 %v175, %v173
    %v238 = vpack.c.b16 %v176, %v174
    %v239 = vpack.c.b16 %v179, %v177
    %v240 = vpack.c.b16 %v180, %v178
    %v241 = vpack.c.b16 %v183, %v181
    %v242 = vpack.c.b16 %v184, %v182
    %v243 = vpack.c.b16 %v187, %v185
    %v244 = vpack.c.b16 %v188, %v186
    %v245 = vpack.c.b16 %v191, %v189
    %v246 = vpack.c.b16 %v192, %v190
    %v247 = vpack.c.b16 %v195, %v193
    %v248 = vpack.c.b16 %v196, %v194
    %v249 = vpack.c.b16 %v199, %v197
    %v250 = vpack.c.b16 %v200, %v198
    %v251 = vpack.c.b16 %v203, %v201
    %v252 = vpack.c.b16 %v204, %v202
    %v253 = vpack.c.b16 %v207, %v205
    %v254 = vpack.c.b16 %v208, %v206
    %v255 = vpack.c.b16 %v211, %v209
    %v256 = vpack.c.b16 %v212, %v210
    %v257 = vpack.c.b16 %v215, %v213
    %v258 = vpack.c.b16 %v216, %v214
    %v259 = vpack.c.b16 %v219, %v217
    %v260 = vpack.c.b16 %v220, %v218
    %v261 = vpack.c.b16 %v223, %v221
    %v262 = vpack.c.b16 %v224, %v222
    %v263 = vpack.c.b16 %v227, %v225
    %v264 = vpack.c.b16 %v228, %v226
    %v265 = vpack.c.b16 %v231, %v229
    %v266 = vpack.c.b16 %v232, %v230
    %v267 = vpack.c.b16 %v235, %v233
    %v268 = vpack.c.b16 %v236, %v234
    %301 = vmatpush.bf16.msra.mxu0 %v251
    %302 = vmatpush.bf16.msra.mxu0 %v249
    %303 = vmatpush.bf16.msra.mxu0 %v247
    %304 = vmatpush.bf16.msra.mxu0 %v245
    %305 = vmatpush.bf16.msra.mxu0 %v243
    %306 = vmatpush.bf16.msra.mxu0 %v241
    %307 = vmatpush.bf16.msra.mxu0 %v239
    %308 = vmatpush.bf16.msra.mxu0 %v237
    %309 = vmatmul.bf16.gmra.mxu0 %v137
    %v310 = vpop.f32.mrf.mxu0
    %v311 = vadd.f32 0.0, %v310
    %v312 = vpop.f32.mrf.mxu0
    %v313 = vadd.f32 0.0, %v312
    %314 = vdwg.mxu0
    %315 = vmatpush.bf16.msra.mxu0 %v267
    %316 = vmatpush.bf16.msra.mxu0 %v265
    %317 = vmatpush.bf16.msra.mxu0 %v263
    %318 = vmatpush.bf16.msra.mxu0 %v261
    %319 = vmatpush.bf16.msra.mxu0 %v259
    %320 = vmatpush.bf16.msra.mxu0 %v257
    %321 = vmatpush.bf16.msra.mxu0 %v255
    %322 = vmatpush.bf16.msra.mxu0 %v253
    %323 = vmatmul.bf16.gmra.mxu0 %v138
    %v324 = vpop.f32.mrf.mxu0
    %v325 = vadd.f32 %v311, %v324
    %v326 = vpop.f32.mrf.mxu0
    %v327 = vadd.f32 %v313, %v326
    %328 = vdwg.mxu0
    %329 = vmatpush.bf16.msra.mxu0 %v252
    %330 = vmatpush.bf16.msra.mxu0 %v250
    %331 = vmatpush.bf16.msra.mxu0 %v248
    %332 = vmatpush.bf16.msra.mxu0 %v246
    %333 = vmatpush.bf16.msra.mxu0 %v244
    %334 = vmatpush.bf16.msra.mxu0 %v242
    %335 = vmatpush.bf16.msra.mxu0 %v240
    %336 = vmatpush.bf16.msra.mxu0 %v238
    %337 = vmatmul.bf16.gmra.mxu0 %v137
    %v338 = vpop.f32.mrf.mxu0
    %v339 = vadd.f32 0.0, %v338
    %v340 = vpop.f32.mrf.mxu0
    %v341 = vadd.f32 0.0, %v340
    %342 = vdwg.mxu0
    %343 = vmatpush.bf16.msra.mxu0 %v268
    %344 = vmatpush.bf16.msra.mxu0 %v266
    %345 = vmatpush.bf16.msra.mxu0 %v264
    %346 = vmatpush.bf16.msra.mxu0 %v262
    %347 = vmatpush.bf16.msra.mxu0 %v260
    %348 = vmatpush.bf16.msra.mxu0 %v258
    %349 = vmatpush.bf16.msra.mxu0 %v256
    %350 = vmatpush.bf16.msra.mxu0 %v254
    %351 = vmatmul.bf16.gmra.mxu0 %v138
    %v352 = vpop.f32.mrf.mxu0
    %v353 = vadd.f32 %v339, %v352
    %v354 = vpop.f32.mrf.mxu0
    %v355 = vadd.f32 %v341, %v354
    %356 = vdwg.mxu0
    %v357 = vadd.f32 %v93, %v325
    %v358 = vadd.f32 %v94, %v353
    %v359 = vadd.f32 %v95, %v327
    %v360 = vadd.f32 %v96, %v355
    %361 = vst [vmem:[#allocation2] sm:$0xff] %v357
    %362 = vst [vmem:[#allocation2 + $0x8] sm:$0xff] %v358
    %363 = vst [vmem:[#allocation2 + $0x10] sm:$0xff] %v359
    %364 = vst [vmem:[#allocation2 + $0x18] sm:$0xff] %v360
    // Predicated region
    $region46: #{tpu_custom_call.1} parent=1 // pred_check
      %p365 = pneg %p85
    $region47: #{tpu_custom_call.1} parent=1 // pred_check_branch
      %367 = sbr.rel (%p365) target = $region49
    $region48: #{tpu_custom_call.1} parent=1 // pred_region
      %v368 = vld [vmem:[#allocation2] sm:$0xff]
      %v369 = vld [vmem:[#allocation2 + $0x8] sm:$0xff]
      %v370 = vld [vmem:[#allocation2 + $0x10] sm:$0xff]
      %v371 = vld [vmem:[#allocation2 + $0x18] sm:$0xff]
      %v372 = vld [vmem:[#allocation8] sm:$0x3]
      %v374 = vperm.slane %v372, 0
      %v375 = vperm.slane %v372, 1
      %v378 = vadd.f32 %v368, %v374
      %v379 = vadd.f32 %v369, %v375
      %v380 = vadd.f32 %v370, %v374
      %v381 = vadd.f32 %v371, %v375
      %v382 = vld [vmem:[#allocation9] sm:$0xff]
      %v383 = vld [vmem:[#allocation9 + $0x8] sm:$0xff]
      %v384 = vunpack.c.l.bf16 %v382
      %v385 = vunpack.c.h.bf16 %v382
      %v386 = vunpack.c.l.bf16 %v383
      %v387 = vunpack.c.h.bf16 %v383
      %v388 = vadd.f32 %v378, %v384
      %v389 = vadd.f32 %v379, %v385
      %v390 = vadd.f32 %v380, %v386
      %v391 = vadd.f32 %v381, %v387
      %v392 = vadd.f32 %v388, %v389
      %393 = vadd.xlane.f32.xlu0 %v392
      %v394 = vpop.xlane.xlu0 %393
      %v395 = vadd.f32 %v390, %v391
      %396 = vadd.xlane.f32.xlu0 %v395
      %v397 = vpop.xlane.xlu0 %396
      %v398 = vrcp.pop 256.0
      %v399 = vmul.f32 256.0, %v398
      %v400 = vsub.f32 1.0, %v399
      %v401 = vmul.f32 %v398, %v400
      %v402 = vadd.f32 %v398, %v401
      %vm403 = vweird.f32 %v398
      %v404 = vsel %vm403, %v398, %v402
      %v405 = vmul.f32 %v394, %v404
      %v406 = vmul.f32 %v397, %v404
      %v407 = vsub.f32 %v388, %v405
      %v408 = vsub.f32 %v389, %v405
      %v409 = vsub.f32 %v390, %v406
      %v410 = vsub.f32 %v391, %v406
      %v411 = vmul.f32 %v407, %v407
      %v412 = vmul.f32 %v408, %v408
      %v413 = vmul.f32 %v409, %v409
      %v414 = vmul.f32 %v410, %v410
      %v415 = vadd.f32 %v411, %v412
      %416 = vadd.xlane.f32.xlu0 %v415
      %v417 = vpop.xlane.xlu0 %416
      %v418 = vadd.f32 %v413, %v414
      %419 = vadd.xlane.f32.xlu0 %v418
      %v420 = vpop.xlane.xlu0 %419
      %v421 = vmul.f32 %v417, %v404
      %v422 = vmul.f32 %v420, %v404
      %v423 = vadd.f32 %v421, 1e-12
      %v424 = vadd.f32 %v422, 1e-12
      %v425 = vrsqrt.pop %v423
      %v426 = vmul.f32 %v425, %v423
      %v427 = vmul.f32 %v426, %v425
      %v428 = vmul.f32 0.5, %v427
      %v429 = vsub.f32 1.5, %v428
      %v430 = vmul.f32 %v425, %v429
      %vm431 = vweird.f32 %v423
      %vm432 = vweird.f32 %v425
      %vm433 = vmor %vm431, %vm432
      %v434 = vsel %vm433, %v425, %v430
      %v435 = vrsqrt.pop %v424
      %v436 = vmul.f32 %v435, %v424
      %v437 = vmul.f32 %v436, %v435
      %v438 = vmul.f32 0.5, %v437
      %v439 = vsub.f32 1.5, %v438
      %v440 = vmul.f32 %v435, %v439
      %vm441 = vweird.f32 %v424
      %vm442 = vweird.f32 %v435
      %vm443 = vmor %vm441, %vm442
      %v444 = vsel %vm443, %v435, %v440
      %v445 = vmul.f32 %v407, %v434
      %v446 = vmul.f32 %v408, %v434
      %v447 = vmul.f32 %v409, %v444
      %v448 = vmul.f32 %v410, %v444
      %v449 = vld [vmem:[%s4] sm:$0x3]
      %v451 = vperm.slane %v449, 0
      %v452 = vperm.slane %v449, 1
      %v455 = vmul.f32 %v445, %v451
      %v456 = vmul.f32 %v446, %v452
      %v457 = vmul.f32 %v447, %v451
      %v458 = vmul.f32 %v448, %v452
      %v459 = vld [vmem:[%s5] sm:$0x3]
      %v461 = vperm.slane %v459, 0
      %v462 = vperm.slane %v459, 1
      %v465 = vadd.f32 %v455, %v461
      %v466 = vadd.f32 %v456, %v462
      %v467 = vadd.f32 %v457, %v461
      %v468 = vadd.f32 %v458, %v462
      %v469 = vpack.c.bf16 %v466, %v465
      %v470 = vpack.c.bf16 %v468, %v467
      %471 = vst [vmem:[#allocation11] sm:$0xff] %v469
      %472 = vst [vmem:[#allocation11 + $0x8] sm:$0xff] %v470
    $region49: #{tpu_custom_call.1} parent=1 // pred_fallthru
      _
    // Predicated region
    $region50: #{tpu_custom_call.1} parent=1 // pred_check
      _
    $region51: #{tpu_custom_call.1} parent=1 // pred_check_branch
      %474 = sbr.rel (0) target = $region53
    $region52: #{tpu_custom_call.1} parent=1 // pred_region
      %476 = vsyncadd [#allocation5], 0
      %s477 = sshll.u32 [#allocation11], 4
      %s478 = int_to_ptr.vmem [resolvable:$true] %s477
      %s479 = sshll.u32 %s6, 4
      %s480 = int_to_ptr.hbm [resolvable:$true] %s479
      %485 = dma.vmem_to_hbm [thread:$0]  %s478, 256, %s480, [#allocation5], 128, 128, 8
    $region53: #{tpu_custom_call.1} parent=1 // pred_fallthru
      _
    // Predicated region
    $region54: #{tpu_custom_call.1} parent=1 // pred_check
      _
    $region55: #{tpu_custom_call.1} parent=1 // pred_check_branch
      %487 = sbr.rel (0) target = $region57
    $region56: #{tpu_custom_call.1} parent=1 // pred_region
      %489 = dma.done [#allocation5], 256
    $region57: #{tpu_custom_call.1} parent=1 // pred_fallthru
      _
    %490 = vsyncpa [#allocation4], 1
    %491 = vsyncpa [#allocation7], 1
    %492 = vsyncpa [#allocation10], 1
    %493 = vsyncpa [#allocation5], 1

</llo_original>
